<compile_context>
chip_gen: v6e
topology: v6e:2x2x1
jax: 0.10.0
libtpu: 0.0.40
codegen_flags: <defaults>
</compile_context>

<pallas_src>
import functools

import jax
import jax.numpy as jnp
from jax import lax
from jax.experimental import pallas as pl
from jax.experimental.pallas import tpu as pltpu

_LANE = 128
_SUBLANE = 8


def _vae_loss_kernel(recon_ref, x_ref, mu_ref, logvar_ref, out_ref, acc_ref,
                     *, rows, row_tile, steps_per_core, need_mask):
    """Fused BCE(sum) + KLD.

    Grid = (cores, steps). Axis 0 is megacore-parallel (each core owns a
    disjoint set of row tiles and its own (8,128) partial-sum slab); axis 1 is
    that core's sequential reduction over tiles. The final reduction of the
    tiny (cores*8, 128) output slab is done by XLA in the wrapper.
    """
    i = pl.program_id(0)          # core-parallel axis
    j = pl.program_id(1)          # sequential reduction axis

    @pl.when(j == 0)
    def _():
        acc_ref[...] = jnp.zeros_like(acc_ref)

    r = recon_ref[...].astype(jnp.float32)
    t = x_ref[...].astype(jnp.float32)
    # PyTorch binary_cross_entropy clamps each log term at -100 *before* the
    # multiply, so t=0 with r=0 (incl. zero padding) contributes exactly 0.
    log_r = jnp.maximum(jnp.log(r), -100.0)
    log_1mr = jnp.maximum(jnp.log1p(-r), -100.0)
    loss = -(t * log_r + (1.0 - t) * log_1mr)

    if need_mask:
        # Mask rows of the (partially) out-of-range tail tile / over-covering
        # clamped blocks on the second core.
        blk = i * steps_per_core + j
        rid = blk * row_tile + lax.broadcasted_iota(jnp.int32, loss.shape, 0)
        loss = jnp.where(rid < rows, loss, 0.0)

    tile_rows = loss.shape[0]
    if tile_rows % _SUBLANE == 0:
        # Pure VPU adds onto a vreg-shaped accumulator; no per-step XLU reduce.
        acc_ref[...] += loss.reshape(
            tile_rows // _SUBLANE, _SUBLANE, _LANE).sum(axis=0)
    else:
        # Tiny input (< 8 rows): a single partial tile, cheap either way.
        acc_ref[0:1, :] += jnp.sum(loss, axis=0, keepdims=True)

    @pl.when(j == steps_per_core - 1)
    def _():
        # Fused KLD (tiny, VMEM-resident inputs); added exactly once (core 0)
        # into a single slot of the partial-sum slab.
        mu = mu_ref[...].astype(jnp.float32)
        lv = logvar_ref[...].astype(jnp.float32)
        kld = -0.5 * jnp.sum(1.0 + lv - mu * mu - jnp.exp(lv))
        row_id = lax.broadcasted_iota(jnp.int32, acc_ref.shape, 0)
        col_id = lax.broadcasted_iota(jnp.int32, acc_ref.shape, 1)
        onehot = (row_id == 0) & (col_id == 0) & (i == 0)
        out_ref[...] = acc_ref[...] + jnp.where(onehot, kld, 0.0)


@functools.partial(jax.jit, static_argnames=("row_tile", "num_cores"))
def vae_loss(recon_x, x, mu, logvar, *, row_tile=2048, num_cores=2):
    n = recon_x.size
    # Flatten: pure dim-merge reshape (no HBM copy, no dtype change — the
    # kernel upcasts to f32 internally, so bf16/fp16 inputs stay narrow in HBM).
    rf = recon_x.reshape(-1)
    xf = x.reshape(-1)
    if n % _LANE != 0:
        # TODO(synk): non-lane-aligned element count needs a (rare) pad copy;
        # recon=0 / x=0 padding contributes exactly zero BCE.
        pad = _LANE - (n % _LANE)
        rf = jnp.pad(rf, (0, pad))
        xf = jnp.pad(xf, (0, pad))
    rows = rf.size // _LANE
    recon2d = rf.reshape(rows, _LANE)
    x2d = xf.reshape(rows, _LANE)

    # Tile selection: (row_tile, 128) f32 blocks (~1 MiB each at row_tile=2048,
    # ~4 MiB with double buffering — within default scoped VMEM on all gens).
    if rows <= row_tile:
        if rows % _SUBLANE == 0 or rows < _SUBLANE:
            tile = rows
        else:
            tile = (rows // _SUBLANE) * _SUBLANE
    else:
        tile = row_tile
    num_blocks = pl.cdiv(rows, tile)

    ncores = max(1, min(num_cores, num_blocks))   # megacore split (helps v7x)
    spc = pl.cdiv(num_blocks, ncores)             # reduction steps per core
    need_mask = (ncores * spc * tile) != rows

    mu2 = mu.reshape(1, -1)
    lv2 = logvar.reshape(1, -1)

    def data_idx(i, j):
        # Clamp so an over-covering core re-reads a valid block (fully masked
        # in-kernel) instead of issuing an out-of-bounds DMA.
        return (jnp.minimum(i * spc + j, num_blocks - 1), 0)

    kernel = functools.partial(
        _vae_loss_kernel,
        rows=rows, row_tile=tile, steps_per_core=spc, need_mask=need_mask)

    partials = pl.pallas_call(
        kernel,
        out_shape=jax.ShapeDtypeStruct((ncores * _SUBLANE, _LANE), jnp.float32),
        grid_spec=pltpu.PrefetchScalarGridSpec(
            num_scalar_prefetch=0,
            grid=(ncores, spc),
            in_specs=[
                pl.BlockSpec((tile, _LANE), data_idx),
                pl.BlockSpec((tile, _LANE), data_idx),
                pl.BlockSpec(mu2.shape, lambda i, j: (0, 0)),
                pl.BlockSpec(lv2.shape, lambda i, j: (0, 0)),
            ],
            out_specs=pl.BlockSpec((_SUBLANE, _LANE), lambda i, j: (i, 0)),
            scratch_shapes=[pltpu.VMEM((_SUBLANE, _LANE), jnp.float32)],
        ),
        compiler_params=pltpu.CompilerParams(
            dimension_semantics=("parallel", "arbitrary")),
    )(recon2d, x2d, mu2, lv2)

    # Final reduction of the tiny (ncores*8, 128) partial-sum slab.
    return jnp.sum(partials)


def _reference_loss(recon_x, x, mu, logvar):
    r = recon_x.astype(jnp.float32)
    t = x.astype(jnp.float32)
    log_r = jnp.maximum(jnp.log(r), -100.0)
    log_1mr = jnp.maximum(jnp.log1p(-r), -100.0)
    bce = jnp.sum(-(t * log_r + (1.0 - t) * log_1mr))
    mu_f = mu.astype(jnp.float32)
    lv_f = logvar.astype(jnp.float32)
    kld = -0.5 * jnp.sum(1.0 + lv_f - mu_f**2 - jnp.exp(lv_f))
    return bce + kld


if __name__ == "__main__":
    key = jax.random.PRNGKey(0)
    k1, k2, k3, k4 = jax.random.split(key, 4)

    B, C, H, W = 2, 4, 16, 16   # image-like reconstruction (NCHW-equivalent)
    Z = 32                      # latent dim

    # recon_x in (0, 1) as a decoder-with-sigmoid would produce.
    recon_x = jax.nn.sigmoid(jax.random.normal(k1, (B, C, H, W), jnp.float32))
    # target x in [0, 1].
    x = jax.random.uniform(k2, (B, C, H, W), jnp.float32)
    mu = jax.random.normal(k3, (B, Z), jnp.float32)
    logvar = 0.5 * jax.random.normal(k4, (B, Z), jnp.float32)

    out = vae_loss(recon_x, x, mu, logvar)
    out = jax.block_until_ready(out)

    ref = _reference_loss(recon_x, x, mu, logvar)
    assert jnp.allclose(out, ref, rtol=1e-5, atol=1e-3), (out, ref)

    print("KERNEL_OK")
</pallas_src>

<mosaic_0001>
module attributes {stable_mosaic.version = 11 : i64} {
  func.func @_vae_loss_kernel(%arg0: i32, %arg1: i32, %arg2: memref<16x128xf32, #tpu.memory_space<vmem>>, %arg3: memref<16x128xf32, #tpu.memory_space<vmem>>, %arg4: memref<1x64xf32, #tpu.memory_space<vmem>>, %arg5: memref<1x64xf32, #tpu.memory_space<vmem>>, %arg6: memref<8x128xf32, #tpu.memory_space<vmem>>, %arg7: memref<8x128xf32, #tpu.memory_space<vmem>>) attributes {dimension_semantics = [#tpu.dimension_semantics<parallel>, #tpu.dimension_semantics<arbitrary>], iteration_bounds = array<i64: 1, 1>, scalar_prefetch = 0 : i64, scratch_operands = 1 : i64, tpu.core_type = #tpu.core_type<tc>, window_params = [{transform_indices = @transform_0, window_bounds = array<i64: 16, 128>}, {transform_indices = @transform_1, window_bounds = array<i64: 16, 128>}, {pipeline_mode = #tpu.pipeline_mode<synchronous>, transform_indices = @transform_2, window_bounds = array<i64: 1, 64>}, {pipeline_mode = #tpu.pipeline_mode<synchronous>, transform_indices = @transform_3, window_bounds = array<i64: 1, 64>}, {transform_indices = @transform_4, window_bounds = array<i64: 8, 128>}]} {
    %c0_i32 = arith.constant 0 : i32
    %0 = arith.cmpi eq, %arg1, %c0_i32 : i32
    %1 = arith.extui %0 : i1 to i32
    %c0_i32_0 = arith.constant 0 : i32
    %2 = arith.cmpi ne, %1, %c0_i32_0 : i32
    scf.if %2 {
      %cst_15 = arith.constant 0.000000e+00 : f32
      %28 = vector.broadcast %cst_15 : f32 to vector<8x128xf32>
      %c0_16 = arith.constant 0 : index
      %c0_17 = arith.constant 0 : index
      %29 = vector.load %arg7[%c0_16, %c0_17] : memref<8x128xf32, #tpu.memory_space<vmem>>, vector<8x128xf32>
      tpu.vector_store %arg7[%c0_16, %c0_17], %28 {strides = array<i32>} : memref<8x128xf32, #tpu.memory_space<vmem>>, vector<8x128xf32>,
    } else {
    }
    %c0 = arith.constant 0 : index
    %c0_1 = arith.constant 0 : index
    %3 = vector.load %arg2[%c0, %c0_1] : memref<16x128xf32, #tpu.memory_space<vmem>>, vector<16x128xf32>
    %c0_2 = arith.constant 0 : index
    %c0_3 = arith.constant 0 : index
    %4 = vector.load %arg3[%c0_2, %c0_3] : memref<16x128xf32, #tpu.memory_space<vmem>>, vector<16x128xf32>
    %5 = math.log %3 : vector<16x128xf32>
    %cst = arith.constant -1.000000e+02 : f32
    %6 = vector.broadcast %cst : f32 to vector<16x128xf32>
    %7 = arith.maximumf %5, %6 : vector<16x128xf32>
    %cst_4 = arith.constant 0.000000e+00 : f32
    %8 = vector.broadcast %cst_4 : f32 to vector<16x128xf32>
    %9 = arith.subf %8, %3 : vector<16x128xf32>
    %10 = math.log1p %9 : vector<16x128xf32>
    %cst_5 = arith.constant -1.000000e+02 : f32
    %11 = vector.broadcast %cst_5 : f32 to vector<16x128xf32>
    %12 = arith.maximumf %10, %11 : vector<16x128xf32>
    %13 = arith.mulf %4, %7 : vector<16x128xf32>
    %cst_6 = arith.constant 1.000000e+00 : f32
    %14 = vector.broadcast %cst_6 : f32 to vector<16x128xf32>
    %15 = arith.subf %14, %4 : vector<16x128xf32>
    %16 = arith.mulf %15, %12 : vector<16x128xf32>
    %17 = arith.addf %13, %16 : vector<16x128xf32>
    %cst_7 = arith.constant 0.000000e+00 : f32
    %18 = vector.broadcast %cst_7 : f32 to vector<16x128xf32>
    %19 = arith.subf %18, %17 : vector<16x128xf32>
    %c0_8 = arith.constant 0 : index
    %c0_9 = arith.constant 0 : index
    %20 = vector.load %arg7[%c0_8, %c0_9] : memref<8x128xf32, #tpu.memory_space<vmem>>, vector<8x128xf32>
    %21 = vector.shape_cast %19 : vector<16x128xf32> to vector<2x8x128xf32>
    %cst_10 = arith.constant dense<0.000000e+00> : vector<8x128xf32>
    %22 = vector.multi_reduction <add>, %21, %cst_10 [0] : vector<2x8x128xf32> to vector<8x128xf32>
    %23 = arith.addf %20, %22 : vector<8x128xf32>
    %c0_11 = arith.constant 0 : index
    %c0_12 = arith.constant 0 : index
    %24 = vector.load %arg7[%c0_11, %c0_12] : memref<8x128xf32, #tpu.memory_space<vmem>>, vector<8x128xf32>
    tpu.vector_store %arg7[%c0_11, %c0_12], %23 {strides = array<i32>} : memref<8x128xf32, #tpu.memory_space<vmem>>, vector<8x128xf32>,
    %c0_i32_13 = arith.constant 0 : i32
    %25 = arith.cmpi eq, %arg1, %c0_i32_13 : i32
    %26 = arith.extui %25 : i1 to i32
    %c0_i32_14 = arith.constant 0 : i32
    %27 = arith.cmpi ne, %26, %c0_i32_14 : i32
    scf.if %27 {
      %c0_15 = arith.constant 0 : index
      %c0_16 = arith.constant 0 : index
      %28 = vector.load %arg4[%c0_15, %c0_16] : memref<1x64xf32, #tpu.memory_space<vmem>>, vector<1x64xf32>
      %c0_17 = arith.constant 0 : index
      %c0_18 = arith.constant 0 : index
      %29 = vector.load %arg5[%c0_17, %c0_18] : memref<1x64xf32, #tpu.memory_space<vmem>>, vector<1x64xf32>
      %cst_19 = arith.constant 1.000000e+00 : f32
      %30 = vector.broadcast %cst_19 : f32 to vector<1x64xf32>
      %31 = arith.addf %30, %29 : vector<1x64xf32>
      %32 = arith.mulf %28, %28 : vector<1x64xf32>
      %33 = arith.subf %31, %32 : vector<1x64xf32>
      %34 = math.exp %29 : vector<1x64xf32>
      %35 = arith.subf %33, %34 : vector<1x64xf32>
      %36 = vector.shape_cast %35 : vector<1x64xf32> to vector<1x1x64xf32>
      %cst_20 = arith.constant dense<0.000000e+00> : vector<1xf32>
      %37 = vector.multi_reduction <add>, %36, %cst_20 [1, 2] : vector<1x1x64xf32> to vector<1xf32>
      %38 = vector.shape_cast %37 : vector<1xf32> to vector<1x1x1xf32>
      %39 = vector.extract %38[0, 0, 0] : f32 from vector<1x1x1xf32>
      %cst_21 = arith.constant -5.000000e-01 : f32
      %40 = arith.mulf %cst_21, %39 : f32
      %41 = tpu.iota {dimensions = array<i32: 0>} : vector<8x128xi32>
      %42 = tpu.iota {dimensions = array<i32: 1>} : vector<8x128xi32>
      %c0_i32_22 = arith.constant 0 : i32
      %43 = vector.broadcast %c0_i32_22 : i32 to vector<8x128xi32>
      %44 = arith.cmpi eq, %41, %43 : vector<8x128xi32>
      %c0_i32_23 = arith.constant 0 : i32
      %45 = vector.broadcast %c0_i32_23 : i32 to vector<8x128xi32>
      %46 = arith.cmpi eq, %42, %45 : vector<8x128xi32>
      %47 = arith.andi %44, %46 : vector<8x128xi1>
      %c0_i32_24 = arith.constant 0 : i32
      %48 = arith.cmpi eq, %arg0, %c0_i32_24 : i32
      %49 = vector.broadcast %48 : i1 to vector<8x128xi1>
      %50 = arith.andi %47, %49 : vector<8x128xi1>
      %c0_25 = arith.constant 0 : index
      %c0_26 = arith.constant 0 : index
      %51 = vector.load %arg7[%c0_25, %c0_26] : memref<8x128xf32, #tpu.memory_space<vmem>>, vector<8x128xf32>
      %cst_27 = arith.constant 0.000000e+00 : f32
      %52 = vector.broadcast %40 : f32 to vector<8x128xf32>
      %53 = vector.broadcast %cst_27 : f32 to vector<8x128xf32>
      %54 = arith.select %50, %52, %53 : vector<8x128xi1>, vector<8x128xf32>
      %55 = arith.addf %51, %54 : vector<8x128xf32>
      %c0_28 = arith.constant 0 : index
      %c0_29 = arith.constant 0 : index
      %56 = vector.load %arg6[%c0_28, %c0_29] : memref<8x128xf32, #tpu.memory_space<vmem>>, vector<8x128xf32>
      tpu.vector_store %arg6[%c0_28, %c0_29], %55 {strides = array<i32>} : memref<8x128xf32, #tpu.memory_space<vmem>>, vector<8x128xf32>,
    } else {
    }
    return
  }
  func.func @transform_0(%arg0: i32, %arg1: i32) -> (i32, i32) {
    %c1_i32 = arith.constant 1 : i32
    %0 = arith.muli %arg0, %c1_i32 : i32
    %1 = arith.addi %0, %arg1 : i32
    %c0_i32 = arith.constant 0 : i32
    %2 = arith.minsi %1, %c0_i32 : i32
    %c0_i32_0 = arith.constant 0 : i32
    %c0_i32_1 = arith.constant 0 : i32
    return %2, %c0_i32_0 : i32, i32
  }
  func.func @transform_1(%arg0: i32, %arg1: i32) -> (i32, i32) {
    %c1_i32 = arith.constant 1 : i32
    %0 = arith.muli %arg0, %c1_i32 : i32
    %1 = arith.addi %0, %arg1 : i32
    %c0_i32 = arith.constant 0 : i32
    %2 = arith.minsi %1, %c0_i32 : i32
    %c0_i32_0 = arith.constant 0 : i32
    %c0_i32_1 = arith.constant 0 : i32
    return %2, %c0_i32_0 : i32, i32
  }
  func.func @transform_2(%arg0: i32, %arg1: i32) -> (i32, i32) {
    %c0_i32 = arith.constant 0 : i32
    %c0_i32_0 = arith.constant 0 : i32
    %c0_i32_1 = arith.constant 0 : i32
    return %c0_i32, %c0_i32_0 : i32, i32
  }
  func.func @transform_3(%arg0: i32, %arg1: i32) -> (i32, i32) {
    %c0_i32 = arith.constant 0 : i32
    %c0_i32_0 = arith.constant 0 : i32
    %c0_i32_1 = arith.constant 0 : i32
    return %c0_i32, %c0_i32_0 : i32, i32
  }
  func.func @transform_4(%arg0: i32, %arg1: i32) -> (i32, i32) {
    %c0_i32 = arith.constant 0 : i32
    %c0_i32_0 = arith.constant 0 : i32
    return %arg0, %c0_i32 : i32, i32
  }
}

</mosaic_0001>

<llo_original>
// kernel: vae_loss.1
$region0: #{vae_loss.1}
  #allocation0 [shape = 'u32[]', space=smem, size = 0x4, offset = 0x4, fixed_abs, tag = 'smem constant byte address 0x4 - core index']
  #allocation1 [shape = 'u32[144,128]{1,0:T(1,128)}', space=vmem, size = 0x12000, scoped, tag = 'internal scratch']
  #allocation2 [shape = 'f32[8,128]{1,0:T(8,128)}', space=vmem, size = 0x1000, scoped, tag = 'scratch operand']
  %s0 = inlined_call_operand.vmem [shape: f32[16,128], index: 0, kind: input, shape index: {}]
  %s1 = inlined_call_operand.vmem [shape: f32[16,128], index: 1, kind: input, shape index: {}]
  %s2 = inlined_call_operand.vmem [shape: f32[1,64], index: 2, kind: input, shape index: {}]
  %s3 = inlined_call_operand.vmem [shape: f32[1,64], index: 3, kind: input, shape index: {}]
  %s4 = inlined_call_operand.vmem [shape: f32[8,128], index: 4, kind: output, shape index: {}]
  %s5 = sld [smem:[#allocation0]]
  $region34: #{vae_loss.1} parent=0
    _
  %s7 = ssub.s32 1, %s5
  %s8 = scalar_select 0, %s7, %s5
  // Predicated region
  $region2: #{vae_loss.1} parent=0 // pred_check
    _
  $region3: #{vae_loss.1} parent=0 // pred_check_branch
    %10 = sbr.rel (0) target = $region5
  $region4: #{vae_loss.1} parent=0 // pred_region
    %s11 = sadd.s32 0, 0
    %p12 = scmp.lt.s32.totalorder %s11, 0
    %s13 = scalar_select %p12, %s11, 0
    %s14 = smul.u32 2, %s13
    %p15 = scmp.lt.s32.totalorder %s14, 1
    %s16 = scalar_select %p15, %s14, 1
    %s17 = smul.addr %s16, 8
    %s18 = scalar_lea.vmem %s0, %s17
    %s19 = sadd.s32 0, 0
    %p20 = scmp.lt.s32.totalorder %s19, 0
    %s21 = scalar_select %p20, %s19, 0
    %s22 = smul.u32 2, %s21
  $region5: #{vae_loss.1} parent=0 // pred_fallthru
    _
  // Predicated region
  $region6: #{vae_loss.1} parent=0 // pred_check
    _
  $region7: #{vae_loss.1} parent=0 // pred_check_branch
    %24 = sbr.rel (0) target = $region9
  $region8: #{vae_loss.1} parent=0 // pred_region
    %s25 = sadd.s32 0, 0
    %p26 = scmp.lt.s32.totalorder %s25, 0
    %s27 = scalar_select %p26, %s25, 0
    %s28 = smul.u32 2, %s27
    %p29 = scmp.lt.s32.totalorder %s28, 1
    %s30 = scalar_select %p29, %s28, 1
    %s31 = smul.addr %s30, 8
    %s32 = scalar_lea.vmem %s1, %s31
    %s33 = sadd.s32 0, 0
    %p34 = scmp.lt.s32.totalorder %s33, 0
    %s35 = scalar_select %p34, %s33, 0
    %s36 = smul.u32 2, %s35
  $region9: #{vae_loss.1} parent=0 // pred_fallthru
    _
  // Predicated region
  $region10: #{vae_loss.1} parent=0 // pred_check
    _
  $region11: #{vae_loss.1} parent=0 // pred_check_branch
    %38 = sbr.rel (0) target = $region13
  $region12: #{vae_loss.1} parent=0 // pred_region
    _
  $region13: #{vae_loss.1} parent=0 // pred_fallthru
    _
  // Predicated region
  $region14: #{vae_loss.1} parent=0 // pred_check
    _
  $region15: #{vae_loss.1} parent=0 // pred_check_branch
    %40 = sbr.rel (0) target = $region17
  $region16: #{vae_loss.1} parent=0 // pred_region
    _
  $region17: #{vae_loss.1} parent=0 // pred_fallthru
    _
  %s41 = sadd.s32 0, 0
  %p42 = scmp.lt.s32.totalorder %s41, 0
  %s43 = scalar_select %p42, %s41, 0
  %s44 = smul.u32 2, %s43
  %p45 = scmp.lt.s32.totalorder %s44, 1
  %s46 = scalar_select %p45, %s44, 1
  %s47 = smul.addr %s46, 8
  %s48 = scalar_lea.vmem %s0, %s47
  %s49 = sadd.s32 0, 0
  %p50 = scmp.lt.s32.totalorder %s49, 0
  %s51 = scalar_select %p50, %s49, 0
  %s52 = smul.u32 2, %s51
  %p53 = scmp.lt.s32.totalorder %s52, 1
  %s54 = scalar_select %p53, %s52, 1
  %s55 = smul.addr %s54, 8
  %s56 = scalar_lea.vmem %s1, %s55
  %s57 = sadd.s32 0, 0
  %p58 = scmp.lt.s32.totalorder %s57, 0
  %s59 = scalar_select %p58, %s57, 0
  %s60 = smul.u32 2, %s59
  %p61 = scmp.lt.s32.totalorder %s60, 1
  %s62 = scalar_select %p61, %s60, 1
  %s63 = smul.addr %s62, 8
  %s64 = scalar_lea.vmem %s0, %s63
  %s65 = sadd.s32 0, 0
  %p66 = scmp.lt.s32.totalorder %s65, 0
  %s67 = scalar_select %p66, %s65, 0
  %s68 = smul.u32 2, %s67
  %s69 = sadd.s32 0, 0
  %p70 = scmp.lt.s32.totalorder %s69, 0
  %s71 = scalar_select %p70, %s69, 0
  %s72 = smul.u32 2, %s71
  %p73 = scmp.lt.s32.totalorder %s72, 1
  %s74 = scalar_select %p73, %s72, 1
  %s75 = smul.addr %s74, 8
  %s76 = scalar_lea.vmem %s1, %s75
  %s77 = sadd.s32 0, 0
  %p78 = scmp.lt.s32.totalorder %s77, 0
  %s79 = scalar_select %p78, %s77, 0
  %s80 = smul.u32 2, %s79
  %p81 = scmp.eq.s32.totalorder 0, 0
  // Predicated region
  $region18: #{vae_loss.1} parent=0 // pred_check
    %p82 = pneg %p81
  $region19: #{vae_loss.1} parent=0 // pred_check_branch
    %84 = sbr.rel (%p82) target = $region21
  $region20: #{vae_loss.1} parent=0 // pred_region
    %85 = vst [vmem:[#allocation2] sm:$0xff] 0.0
  $region21: #{vae_loss.1} parent=0 // pred_fallthru
    _
  %v86 = vld [vmem:[%s64] sm:$0xff]
  %v87 = vld [vmem:[%s64 + $0x8] sm:$0xff]
  %v88 = vld [vmem:[%s76] sm:$0xff]
  %v89 = vld [vmem:[%s76 + $0x8] sm:$0xff]
  %v90 = vlog2.pop %v86
  %v91 = vmul.f32 %v90, 0.6931472
  %v92 = vlog2.pop %v87
  %v93 = vmul.f32 %v92, 0.6931472
  %v94 = vmax.f32 %v91, -100.0
  %v95 = vmax.f32 %v93, -100.0
  %v96 = vsub.f32 0.0, %v86
  %v97 = vsub.f32 0.0, %v87
  %v98 = vadd.f32 %v96, 1.0
  %v99 = vlog2.pop %v98
  %v100 = vmul.f32 %v99, 0.6931472
  %v101 = vmul.f32 -0.5, %v96
  %v102 = vadd.f32 %v101, 1.0
  %v103 = vmul.f32 %v102, %v96
  %v104 = vand.u32 2147483647, %v96
  %vm105 = vcmp.lt.f32.partialorder %v104, 0.0004427343
  %v106 = vsel %vm105, %v103, %v100
  %v107 = vadd.f32 %v97, 1.0
  %v108 = vlog2.pop %v107
  %v109 = vmul.f32 %v108, 0.6931472
  %v110 = vmul.f32 -0.5, %v97
  %v111 = vadd.f32 %v110, 1.0
  %v112 = vmul.f32 %v111, %v97
  %v113 = vand.u32 2147483647, %v97
  %vm114 = vcmp.lt.f32.partialorder %v113, 0.0004427343
  %v115 = vsel %vm114, %v112, %v109
  %v116 = vmax.f32 %v106, -100.0
  %v117 = vmax.f32 %v115, -100.0
  %v118 = vmul.f32 %v88, %v94
  %v119 = vmul.f32 %v89, %v95
  %v120 = vsub.f32 1.0, %v88
  %v121 = vsub.f32 1.0, %v89
  %v122 = vmul.f32 %v120, %v116
  %v123 = vmul.f32 %v121, %v117
  %v124 = vadd.f32 %v118, %v122
  %v125 = vadd.f32 %v119, %v123
  %v126 = vsub.f32 0.0, %v124
  %v127 = vsub.f32 0.0, %v125
  %v128 = vld [vmem:[#allocation2] sm:$0xff]
  %v129 = vadd.f32 %v126, %v127
  %v130 = vadd.f32 %v128, %v129
  %131 = vst [vmem:[#allocation2] sm:$0xff] %v130
  // Predicated region
  $region22: #{vae_loss.1} parent=0 // pred_check
    %p132 = pneg %p81
  $region23: #{vae_loss.1} parent=0 // pred_check_branch
    %134 = sbr.rel (%p132) target = $region25
  $region24: #{vae_loss.1} parent=0 // pred_region
    %v135 = vld [vmem:[%s2] sm:$0x1]
    %v136 = vld [vmem:[%s3] sm:$0x1]
    %v137 = vadd.f32 %v136, 1.0
    %v138 = vmul.f32 %v135, %v135
    %v139 = vsub.f32 %v137, %v138
    %v140 = vmul.f32 %v136, 1.442695
    %v141 = vpow.pop %v140
    %v142 = vsub.f32 %v139, %v141
    %vm143 = vcmask 516096
    %v144 = vsel %vm143, %v142, 0.0
    %145 = vadd.xlane.f32.xlu0 %v144
    %v146 = vpop.xlane.xlu0 %145
    %v147 = vrot.slane %v146, 4
    %v148 = vadd.f32 %v146, %v147
    %v149 = vrot.slane %v148, 2
    %v150 = vadd.f32 %v148, %v149
    %v151 = vrot.slane %v150, 1
    %v152 = vadd.f32 %v150, %v151
    %s153 = vtos %v152
    %s154 = smul.f32 %s153, -0.5
    %v155 = vlaneseq
    %v156 = vshrl.u32 %v155, 7
    %v157 = vlaneseq
    %v158 = vand.u32 %v157, 127
    %vm159 = vcmp.eq.s32.totalorder %v156, 0
    %vm160 = vcmp.eq.s32.totalorder %v158, 0
    %vm161 = vmand %vm159, %vm160
    %p162 = scmp.eq.s32.totalorder 0, 0
    %s163 = scalar_select %p162, 1, 0
    %v164 = vstv %s163
    %vm165 = vcmp.eq.s32.totalorder %v164, 1
    %vm166 = vmand %vm161, %vm165
    %v167 = vld [vmem:[#allocation2] sm:$0xff]
    %v168 = vstv %s154
    %v169 = vsel %vm166, %v168, 0.0
    %v170 = vadd.f32 %v167, %v169
    %171 = vst [vmem:[%s4] sm:$0xff] %v170
  $region25: #{vae_loss.1} parent=0 // pred_fallthru
    _
  // Predicated region
  $region26: #{vae_loss.1} parent=0 // pred_check
    _
  $region27: #{vae_loss.1} parent=0 // pred_check_branch
    %173 = sbr.rel (0) target = $region29
  $region28: #{vae_loss.1} parent=0 // pred_region
    _
  $region29: #{vae_loss.1} parent=0 // pred_fallthru
    _
  // Predicated region
  $region30: #{vae_loss.1} parent=0 // pred_check
    _
  $region31: #{vae_loss.1} parent=0 // pred_check_branch
    %175 = sbr.rel (0) target = $region33
  $region32: #{vae_loss.1} parent=0 // pred_region
    _
  $region33: #{vae_loss.1} parent=0 // pred_fallthru
    _

</llo_original>
